<compile_context>
chip_gen: v5e
topology: v5e:2x2
jax: 0.10.0
libtpu: 0.0.40
codegen_flags: <defaults>
</compile_context>

<pallas_src>
import jax
import jax.numpy as jnp
from jax.experimental import pallas as pl
from jax.experimental.pallas import tpu as pltpu


_TARGET_SLAB_BYTES = 4 << 20  # per-block f32 working-slab budget (~4 MiB)


def _gradient_kernel(x_ref, o_ref):
    """Sobel |grad_x| + |grad_y| on one (Nb, H, W) block (channel squeezed).

    pltpu.roll follows jnp.roll semantics, so roll(x, H-k, axis=1)[i] == x[i+k];
    wrapped rows/cols land outside the valid (Ho, Wo) window and are never
    stored (or are stripped by the wrapper on the lane-dense path).
    """
    H = x_ref.shape[1]
    W = x_ref.shape[2]
    Ho = o_ref.shape[1]
    Wout = o_ref.shape[2]

    x = x_ref[...].astype(jnp.float32)  # any dtype cast happens in-kernel

    # |grad_x|: vertical [1,2,1] smoothing, then horizontal [-1,0,1] difference.
    v = x + 2.0 * pltpu.roll(x, H - 1, 1) + pltpu.roll(x, H - 2, 1)   # v[i]=x[i]+2x[i+1]+x[i+2]
    acc = jnp.abs(pltpu.roll(v, W - 2, 2) - v)                        # |v[:,j+2]-v[:,j]|; v dies

    # |grad_y|: horizontal [1,2,1] smoothing, then vertical [-1,0,1]^T difference.
    h = x + 2.0 * pltpu.roll(x, W - 1, 2) + pltpu.roll(x, W - 2, 2)   # h[:,j]=x[:,j]+2x[:,j+1]+x[:,j+2]
    acc = acc + jnp.abs(pltpu.roll(h, H - 2, 1) - h)                  # |h[i+2]-h[i]|

    # Valid region is the top-left (Ho, Wo) corner.  When Wout == W the last
    # two lanes hold wrapped (finite) values that the wrapper slices away,
    # keeping the store lane-dense / unmasked.
    o_ref[...] = acc[:, :Ho, :Wout].astype(o_ref.dtype)


def _choose_batch_block(n: int, h: int, w: int) -> int:
    """Largest divisor of n keeping the f32 working slab under the target."""
    per_image_f32 = h * w * 4
    nb_cap = max(1, _TARGET_SLAB_BYTES // per_image_f32)
    # Keep >=2 grid points only when the batch is big enough that halving the
    # block is essentially free (feeds both TCs on megacore parts like v7x,
    # costs nothing measurable on single-TC v5e/v6e).
    if n >= 8:
        nb_cap = min(nb_cap, n // 2)
    nb = 1
    for d in range(1, n + 1):
        if n % d == 0 and d <= nb_cap:
            nb = d
    return nb


def _gradient_pallas(x_nchw: jax.Array, out_dtype) -> jax.Array:
    """Single batch-tiled pallas_call; assumes the per-image slab fits VMEM."""
    n, c, h, w = x_nchw.shape
    ho, wo = h - 2, w - 2
    itemsize = jnp.dtype(x_nchw.dtype).itemsize
    out_itemsize = jnp.dtype(out_dtype).itemsize

    # Lane-dense output when W is a multiple of 128: write a full-W slab and
    # strip the 2 tail columns in the wrapper.  Otherwise store exactly Wo
    # (padding a tiny W up to 128 would only inflate HBM traffic).
    lane_dense = (w % 128 == 0)
    w_out = w if lane_dense else wo

    nb = _choose_batch_block(n, h, w)
    grid = (n // nb,)

    # VMEM budget: double-buffered in/out blocks + ~4 live f32 slabs of
    # in-kernel temporaries (x, v/h, rolled copy, acc) + headroom.  Block
    # sizing keeps this well under v7x's 64 MiB physical VMEM.
    slab = nb * h * w * 4
    in_block = nb * h * w * itemsize
    out_block = nb * ho * w_out * out_itemsize
    needed = 2 * (in_block + out_block) + 4 * slab
    vmem_limit = int(min(max(needed + (4 << 20), 16 << 20), 48 << 20))

    cost = pl.CostEstimate(
        flops=12 * n * h * w,
        transcendentals=0,
        bytes_accessed=n * (h * w * itemsize + ho * w_out * out_itemsize),
    )

    out = pl.pallas_call(
        _gradient_kernel,
        out_shape=jax.ShapeDtypeStruct((n, 1, ho, w_out), out_dtype),
        grid_spec=pltpu.PrefetchScalarGridSpec(
            num_scalar_prefetch=0,
            grid=grid,
            in_specs=[
                # Channel dim squeezed out of the kernel view; NCHW fed directly.
                pl.BlockSpec((nb, None, h, w), lambda b: (b, 0, 0, 0)),
            ],
            out_specs=pl.BlockSpec((nb, None, ho, w_out), lambda b: (b, 0, 0, 0)),
        ),
        compiler_params=pltpu.CompilerParams(
            dimension_semantics=("parallel",),
            vmem_limit_bytes=vmem_limit,
        ),
        cost_estimate=cost,
    )(x_nchw)

    if lane_dense:
        out = out[..., :wo]   # strip the 2 wrapped tail columns (layout plumbing)
    return out


def gradient_net(x_nchw: jax.Array, *, band_split_bytes: int = _TARGET_SLAB_BYTES) -> jax.Array:
    """Pallas implementation of GradientNet.forward for NCHW input with C == 1."""
    n, c, h, w = x_nchw.shape
    assert c == 1, "GradientNet's fixed Sobel kernels expect a single input channel"
    assert h >= 3 and w >= 3, "valid 3x3 convolution requires H >= 3 and W >= 3"

    out_dtype = x_nchw.dtype if jnp.issubdtype(x_nchw.dtype, jnp.floating) else jnp.float32

    # Common case: the whole (batch-tiled) image fits the per-block budget.
    if h * w * 4 <= band_split_bytes:
        return _gradient_pallas(x_nchw, out_dtype)

    # Large frames: process overlapping row bands so every block fits VMEM
    # (v7x has only 64 MiB physical per TensorCore).  Band inputs are kept at
    # a multiple of 8 rows so sublane rolls stay on the aligned path.
    ho = h - 2
    rows_budget = max(8, band_split_bytes // (w * 4))
    band_in_rows = max(8, (rows_budget // 8) * 8)
    band_rows = band_in_rows - 2                      # output rows per band
    outs = []
    s = 0
    while s < ho:
        bh = min(band_rows, ho - s)
        x_band = jax.lax.slice_in_dim(x_nchw, s, s + bh + 2, axis=2)
        outs.append(_gradient_pallas(x_band, out_dtype))
        s += bh
    return jnp.concatenate(outs, axis=2)


def _reference(x_nchw: jax.Array) -> jax.Array:
    """Pure-JAX reference (lax.conv) used only for correctness checks."""
    x = x_nchw.astype(jnp.float32)
    kx = jnp.array([[-1.0, 0.0, 1.0],
                    [-2.0, 0.0, 2.0],
                    [-1.0, 0.0, 1.0]], jnp.float32)[None, None]
    ky = jnp.array([[-1.0, -2.0, -1.0],
                    [0.0, 0.0, 0.0],
                    [1.0, 2.0, 1.0]], jnp.float32)[None, None]
    gx = jax.lax.conv_general_dilated(x, kx, (1, 1), "VALID",
                                      dimension_numbers=("NCHW", "OIHW", "NCHW"))
    gy = jax.lax.conv_general_dilated(x, ky, (1, 1), "VALID",
                                      dimension_numbers=("NCHW", "OIHW", "NCHW"))
    return jnp.abs(gx) + jnp.abs(gy)


if __name__ == "__main__":
    key = jax.random.PRNGKey(0)
    # Small NCHW input with C == 1 (the module's Sobel weights are single
    # channel).  W = 128 keeps the lane axis dense and exercises the
    # lane-dense output path.
    x = jax.random.normal(key, (2, 1, 16, 128), dtype=jnp.float32)

    out = gradient_net(x)
    jax.block_until_ready(out)
    ref = _reference(x)
    assert out.shape == (2, 1, 14, 126), out.shape
    assert jnp.allclose(out, ref, atol=1e-4, rtol=1e-4), "mismatch vs reference"

    # Exercise the large-frame row-band fallback with an artificially low cap
    # (bands of 6 output rows / 8 input rows, all sublane-aligned).
    x2 = jax.random.normal(jax.random.PRNGKey(1), (1, 1, 32, 128), dtype=jnp.float32)
    out2 = gradient_net(x2, band_split_bytes=4096)
    jax.block_until_ready(out2)
    ref2 = _reference(x2)
    assert out2.shape == (1, 1, 30, 126), out2.shape
    assert jnp.allclose(out2, ref2, atol=1e-4, rtol=1e-4), "band-tiled mismatch vs reference"

    print("KERNEL_OK")
</pallas_src>

<mosaic_0001>
module attributes {stable_mosaic.version = 11 : i64} {
  func.func @_gradient_kernel(%arg0: i32, %arg1: memref<2x1x16x128xf32, #tpu.memory_space<vmem>>, %arg2: memref<2x1x14x128xf32, #tpu.memory_space<vmem>>) attributes {dimension_semantics = [#tpu.dimension_semantics<parallel>], iteration_bounds = array<i64: 1>, scalar_prefetch = 0 : i64, scratch_operands = 0 : i64, tpu.core_type = #tpu.core_type<tc>, window_params = [{transform_indices = @transform_0, window_bounds = array<i64: 2, 1, 16, 128>}, {transform_indices = @transform_1, window_bounds = array<i64: 2, 1, 14, 128>}]} {
    %c0 = arith.constant 0 : index
    %c0_0 = arith.constant 0 : index
    %c0_1 = arith.constant 0 : index
    %c0_2 = arith.constant 0 : index
    %0 = vector.load %arg1[%c0, %c0_0, %c0_1, %c0_2] : memref<2x1x16x128xf32, #tpu.memory_space<vmem>>, vector<2x1x16x128xf32>
    %1 = vector.shape_cast %0 : vector<2x1x16x128xf32> to vector<2x16x128xf32>
    %c15_i32 = arith.constant 15 : i32
    %2 = tpu.dynamic_rotate %1 by %c15_i32 dim 1 : vector<2x16x128xf32>, i32 -> vector<2x16x128xf32>
    %cst = arith.constant 2.000000e+00 : f32
    %3 = vector.broadcast %cst : f32 to vector<2x16x128xf32>
    %4 = arith.mulf %3, %2 : vector<2x16x128xf32>
    %5 = arith.addf %1, %4 : vector<2x16x128xf32>
    %c14_i32 = arith.constant 14 : i32
    %6 = tpu.dynamic_rotate %1 by %c14_i32 dim 1 : vector<2x16x128xf32>, i32 -> vector<2x16x128xf32>
    %7 = arith.addf %5, %6 : vector<2x16x128xf32>
    %c126_i32 = arith.constant 126 : i32
    %8 = tpu.dynamic_rotate %7 by %c126_i32 dim 2 : vector<2x16x128xf32>, i32 -> vector<2x16x128xf32>
    %9 = arith.subf %8, %7 : vector<2x16x128xf32>
    %10 = math.absf %9 : vector<2x16x128xf32>
    %c127_i32 = arith.constant 127 : i32
    %11 = tpu.dynamic_rotate %1 by %c127_i32 dim 2 : vector<2x16x128xf32>, i32 -> vector<2x16x128xf32>
    %cst_3 = arith.constant 2.000000e+00 : f32
    %12 = vector.broadcast %cst_3 : f32 to vector<2x16x128xf32>
    %13 = arith.mulf %12, %11 : vector<2x16x128xf32>
    %14 = arith.addf %1, %13 : vector<2x16x128xf32>
    %c126_i32_4 = arith.constant 126 : i32
    %15 = tpu.dynamic_rotate %1 by %c126_i32_4 dim 2 : vector<2x16x128xf32>, i32 -> vector<2x16x128xf32>
    %16 = arith.addf %14, %15 : vector<2x16x128xf32>
    %c14_i32_5 = arith.constant 14 : i32
    %17 = tpu.dynamic_rotate %16 by %c14_i32_5 dim 1 : vector<2x16x128xf32>, i32 -> vector<2x16x128xf32>
    %18 = arith.subf %17, %16 : vector<2x16x128xf32>
    %19 = math.absf %18 : vector<2x16x128xf32>
    %20 = arith.addf %10, %19 : vector<2x16x128xf32>
    %21 = vector.extract_strided_slice %20 {offsets = [0, 0, 0], sizes = [2, 14, 128], strides = [1, 1, 1]} : vector<2x16x128xf32> to vector<2x14x128xf32>
    %c0_6 = arith.constant 0 : index
    %c0_7 = arith.constant 0 : index
    %c0_8 = arith.constant 0 : index
    %c0_9 = arith.constant 0 : index
    %22 = vector.load %arg2[%c0_6, %c0_7, %c0_8, %c0_9] : memref<2x1x14x128xf32, #tpu.memory_space<vmem>>, vector<2x1x14x128xf32>
    %23 = vector.shape_cast %22 : vector<2x1x14x128xf32> to vector<2x14x128xf32>
    %24 = vector.shape_cast %21 : vector<2x14x128xf32> to vector<2x1x14x128xf32>
    tpu.vector_store %arg2[%c0_6, %c0_7, %c0_8, %c0_9], %24 {strides = array<i32>} : memref<2x1x14x128xf32, #tpu.memory_space<vmem>>, vector<2x1x14x128xf32>,
    return
  }
  func.func @transform_0(%arg0: i32) -> (i32, i32, i32, i32) {
    %c0_i32 = arith.constant 0 : i32
    %c0_i32_0 = arith.constant 0 : i32
    %c0_i32_1 = arith.constant 0 : i32
    %c0_i32_2 = arith.constant 0 : i32
    return %arg0, %c0_i32, %c0_i32_0, %c0_i32_1 : i32, i32, i32, i32
  }
  func.func @transform_1(%arg0: i32) -> (i32, i32, i32, i32) {
    %c0_i32 = arith.constant 0 : i32
    %c0_i32_0 = arith.constant 0 : i32
    %c0_i32_1 = arith.constant 0 : i32
    %c0_i32_2 = arith.constant 0 : i32
    return %arg0, %c0_i32, %c0_i32_0, %c0_i32_1 : i32, i32, i32, i32
  }
}

</mosaic_0001>

<llo_original>
// kernel: tpu_custom_call.1
$region0: #{tpu_custom_call.1}
  #allocation0 [shape = 'u32[]', space=smem, size = 0x4, offset = 0x4, fixed_abs, tag = 'smem constant byte address 0x4 - core index']
  #allocation1 [shape = 'u32[72,128]{1,0:T(1,128)}', space=vmem, size = 0x9000, scoped, tag = 'internal scratch']
  %s0 = inlined_call_operand.hbm [shape: f32[2,1,16,128], index: 0, kind: input, shape index: {}]
  %s1 = inlined_call_operand.vmem [shape: f32[2,1,14,128], index: 1, kind: output, shape index: {}]
  %s2 = sld [smem:[#allocation0]]
  $region18: #{tpu_custom_call.1} parent=0
    _
  %s4 = ssub.s32 1, %s2
  %s5 = scalar_select 0, %s4, %s2
  $region1: #{tpu_custom_call.1} parent=0
    #allocation2 [shape = 'u8[16384]{0}', space=vmem, size = 0x4000, scoped, tag = 'input window, operand 0, single buffered']
    #allocation3 [shape = 's32[1]{0}', space=sflag, size = 0x4, scoped, tag = 'scoped memory for tpu_custom_call.1']
    %6 = vsyncpa [#allocation3], 0
    // Predicated region
    $region2: #{tpu_custom_call.1} parent=1 // pred_check
      _
    $region3: #{tpu_custom_call.1} parent=1 // pred_check_branch
      %8 = sbr.rel (0) target = $region5
    $region4: #{tpu_custom_call.1} parent=1 // pred_region
      %10 = vsyncadd [#allocation3], 0
      %s11 = sshll.u32 %s0, 4
      %s12 = int_to_ptr.hbm [resolvable:$true] %s11
      %s13 = sshll.u32 [#allocation2], 4
      %s14 = int_to_ptr.vmem [resolvable:$true] %s13
      %19 = dma.hbm_to_vmem [thread:$0]  %s12, 512, %s14, [#allocation3], 128, 128, 8
    $region5: #{tpu_custom_call.1} parent=1 // pred_fallthru
      _
    // Predicated region
    $region6: #{tpu_custom_call.1} parent=1 // pred_check
      _
    $region7: #{tpu_custom_call.1} parent=1 // pred_check_branch
      %21 = sbr.rel (0) target = $region9
    $region8: #{tpu_custom_call.1} parent=1 // pred_region
      %23 = dma.done [#allocation3], 512
    $region9: #{tpu_custom_call.1} parent=1 // pred_fallthru
      _
    %v24 = vld [vmem:[#allocation2] sm:$0xff]
    %v25 = vld [vmem:[#allocation2 + $0x8] sm:$0xff]
    %v26 = vld [vmem:[#allocation2 + $0x10] sm:$0xff]
    %v27 = vld [vmem:[#allocation2 + $0x18] sm:$0xff]
    %v28 = vrot.slane %v24, 1
    %v29 = vrot.slane %v26, 1
    %v30 = vrot.slane %v25, 1
    %v31 = vrot.slane %v27, 1
    %v32 = vlaneseq
    %v33 = vshrl.u32 %v32, 7
    %vm34 = vcmp.lt.s32.totalorder %v33, 7
    %v35 = vsel %vm34, %v28, %v30
    %v36 = vsel %vm34, %v29, %v31
    %v37 = vsel %vm34, %v30, %v28
    %v38 = vsel %vm34, %v31, %v29
    %v39 = vmul.f32 %v35, 2.0
    %v40 = vmul.f32 %v37, 2.0
    %v41 = vmul.f32 %v36, 2.0
    %v42 = vmul.f32 %v38, 2.0
    %v43 = vadd.f32 %v24, %v39
    %v44 = vadd.f32 %v25, %v40
    %v45 = vadd.f32 %v26, %v41
    %v46 = vadd.f32 %v27, %v42
    %v47 = vrot.slane %v24, 2
    %v48 = vrot.slane %v26, 2
    %v49 = vrot.slane %v25, 2
    %v50 = vrot.slane %v27, 2
    %vm51 = vcmp.lt.s32.totalorder %v33, 6
    %v52 = vsel %vm51, %v47, %v49
    %v53 = vsel %vm51, %v48, %v50
    %v54 = vsel %vm51, %v49, %v47
    %v55 = vsel %vm51, %v50, %v48
    %v56 = vadd.f32 %v43, %v52
    %v57 = vadd.f32 %v44, %v54
    %v58 = vadd.f32 %v45, %v53
    %v59 = vadd.f32 %v46, %v55
    %60 = vrot.lane.b32.xlu0 %v56, 126
    %v61 = vpop.permute.xlu0 %60
    %62 = vrot.lane.b32.xlu0 %v57, 126
    %v63 = vpop.permute.xlu0 %62
    %64 = vrot.lane.b32.xlu0 %v58, 126
    %v65 = vpop.permute.xlu0 %64
    %66 = vrot.lane.b32.xlu0 %v59, 126
    %v67 = vpop.permute.xlu0 %66
    %v68 = vsub.f32 %v61, %v56
    %v69 = vsub.f32 %v63, %v57
    %v70 = vsub.f32 %v65, %v58
    %v71 = vsub.f32 %v67, %v59
    %v72 = vand.u32 2147483647, %v68
    %v73 = vand.u32 2147483647, %v69
    %v74 = vand.u32 2147483647, %v70
    %v75 = vand.u32 2147483647, %v71
    %76 = vrot.lane.b32.xlu0 %v24, 127
    %v77 = vpop.permute.xlu0 %76
    %78 = vrot.lane.b32.xlu0 %v25, 127
    %v79 = vpop.permute.xlu0 %78
    %80 = vrot.lane.b32.xlu0 %v26, 127
    %v81 = vpop.permute.xlu0 %80
    %82 = vrot.lane.b32.xlu0 %v27, 127
    %v83 = vpop.permute.xlu0 %82
    %v84 = vmul.f32 %v77, 2.0
    %v85 = vmul.f32 %v79, 2.0
    %v86 = vmul.f32 %v81, 2.0
    %v87 = vmul.f32 %v83, 2.0
    %v88 = vadd.f32 %v24, %v84
    %v89 = vadd.f32 %v25, %v85
    %v90 = vadd.f32 %v26, %v86
    %v91 = vadd.f32 %v27, %v87
    %92 = vrot.lane.b32.xlu0 %v24, 126
    %v93 = vpop.permute.xlu0 %92
    %94 = vrot.lane.b32.xlu0 %v25, 126
    %v95 = vpop.permute.xlu0 %94
    %96 = vrot.lane.b32.xlu0 %v26, 126
    %v97 = vpop.permute.xlu0 %96
    %98 = vrot.lane.b32.xlu0 %v27, 126
    %v99 = vpop.permute.xlu0 %98
    %v100 = vadd.f32 %v88, %v93
    %v101 = vadd.f32 %v89, %v95
    %v102 = vadd.f32 %v90, %v97
    %v103 = vadd.f32 %v91, %v99
    %v104 = vrot.slane %v100, 2
    %v105 = vrot.slane %v102, 2
    %v106 = vrot.slane %v101, 2
    %v107 = vrot.slane %v103, 2
    %v108 = vsel %vm51, %v104, %v106
    %v109 = vsel %vm51, %v105, %v107
    %v110 = vsel %vm51, %v106, %v104
    %v111 = vsel %vm51, %v107, %v105
    %v112 = vsub.f32 %v108, %v100
    %v113 = vsub.f32 %v110, %v101
    %v114 = vsub.f32 %v109, %v102
    %v115 = vsub.f32 %v111, %v103
    %v116 = vand.u32 2147483647, %v112
    %v117 = vand.u32 2147483647, %v113
    %v118 = vand.u32 2147483647, %v114
    %v119 = vand.u32 2147483647, %v115
    %v120 = vadd.f32 %v72, %v116
    %v121 = vadd.f32 %v73, %v117
    %v122 = vadd.f32 %v74, %v118
    %v123 = vadd.f32 %v75, %v119
    %124 = vst [vmem:[%s1] sm:$0xff] %v120
    %125 = vst [vmem:[%s1 + $0x8] sm:$0x3f] %v121
    %126 = vst [vmem:[%s1 + $0x10] sm:$0xff] %v122
    %127 = vst [vmem:[%s1 + $0x18] sm:$0x3f] %v123
    // Predicated region
    $region10: #{tpu_custom_call.1} parent=1 // pred_check
      _
    $region11: #{tpu_custom_call.1} parent=1 // pred_check_branch
      %129 = sbr.rel (0) target = $region13
    $region12: #{tpu_custom_call.1} parent=1 // pred_region
      _
    $region13: #{tpu_custom_call.1} parent=1 // pred_fallthru
      _
    // Predicated region
    $region14: #{tpu_custom_call.1} parent=1 // pred_check
      _
    $region15: #{tpu_custom_call.1} parent=1 // pred_check_branch
      %131 = sbr.rel (0) target = $region17
    $region16: #{tpu_custom_call.1} parent=1 // pred_region
      _
    $region17: #{tpu_custom_call.1} parent=1 // pred_fallthru
      _
    %132 = vsyncpa [#allocation3], 1

</llo_original>
